<compile_context>
chip_gen: v7x
topology: tpu7x:2x2x1
jax: 0.10.0
libtpu: 0.0.40
codegen_flags: <defaults>
</compile_context>

<pallas_src>
from math import sqrt

import jax
import jax.numpy as jnp
from jax.experimental import pallas as pl
from jax.experimental.pallas import tpu as pltpu

EPSILON = 1e-8


# ----------------------------------------------------------------------------
# Kernel body: one (batch, spatial-tile, O-tile) grid step.
# ----------------------------------------------------------------------------
def _conv2dmod_kernel(scale_ref, demod_ref, w_ref, cols_ref, o_ref):
    # scale_ref: (1, 1, KKC)   f32  (y + 1), tiled per tap (c fastest); per-batch
    # demod_ref: (1, TO, 1)    f32  precomputed rsqrt demod factor (ones if off)
    # w_ref:     (TO, KKC)     bf16 base weights, columns ordered (ki, kj, c)
    # cols_ref:  (1, KKC, THW) bf16 im2col patches; resident across the O sweep
    # o_ref:     (1, TO, THW)
    w = w_ref[...].astype(jnp.float32)            # (TO, KKC)
    s = scale_ref[0]                              # (1, KKC)  lane-aligned bcast
    d = demod_ref[0]                              # (TO, 1)   sublane bcast
    wmod = (w * s * d).astype(jnp.bfloat16)       # modulate + demodulate, f32

    # Single fused matmul: bf16 operands, f32 accumulation on the MXU.
    acc = jnp.dot(wmod, cols_ref[0], preferred_element_type=jnp.float32)

    # Lane-dense (THW multiple of 128 or full dim) store.
    o_ref[0] = acc.astype(o_ref.dtype)


# ----------------------------------------------------------------------------
# VMEM-budget-aware tiling.
# ----------------------------------------------------------------------------
def _vmem_capacity_bytes():
    try:
        return int(pltpu.get_tpu_info().vmem_capacity_bytes)
    except Exception:
        return 64 * 1024 * 1024  # conservative fallback (v7x per-TensorCore)


def _divisor_tiles(total, mult):
    """Tile sizes that evenly divide `total` and are multiples of `mult`
    (descending).  Falls back to the full dimension, which is always
    layout-legal for a BlockSpec."""
    opts = [t for t in range(mult, total + 1, mult) if total % t == 0]
    if not opts:
        opts = [total]
    return sorted(set(opts), reverse=True)


def _block_bytes(to, thw, kkc, out_bytes):
    """Estimated VMEM footprint for one grid step (double-buffered blocks +
    in-kernel temporaries)."""
    dbl = 2 * (kkc * thw * 2          # cols  (bf16)
               + to * kkc * 2         # weight (bf16)
               + to * thw * out_bytes # output tile
               + kkc * 4              # scale (f32)
               + to * 4)              # demod (f32)
    temps = to * kkc * 6 + to * thw * 4   # wmod f32 + bf16 copy, f32 acc
    return dbl + temps


def _select_tiles(O, HW, kkc, out_bytes, block_budget):
    to_opts = [t for t in _divisor_tiles(O, 8) if t <= 256]
    if not to_opts:
        to_opts = [min(_divisor_tiles(O, 8))]
    thw_opts = [t for t in _divisor_tiles(HW, 128) if t <= 4096]
    if not thw_opts:
        thw_opts = [min(_divisor_tiles(HW, 128))]

    best = None
    for to in to_opts:
        for thw in thw_opts:
            if _block_bytes(to, thw, kkc, out_bytes) > block_budget:
                continue
            # Prefer the largest MXU tile; tie-break towards a larger spatial
            # tile (spend spare VMEM on THW rather than deeper buffering).
            key = (to * thw, thw)
            if best is None or key > best[0]:
                best = (key, to, thw)
    if best is None:
        raise ValueError(
            "Conv2DMod: no (TO, THW) tiling fits the VMEM block budget "
            f"({block_budget} bytes) for O={O}, HW={HW}, KKC={kkc}; "
            "reduce the spatial size or channel count.")
    return best[1], best[2]


# ----------------------------------------------------------------------------
# Wrapper.
# ----------------------------------------------------------------------------
def conv2d_mod(x, y, weight, *, demod=True, stride=1, dilation=1,
               out_dtype=None):
    """Pallas implementation of Conv2DMod.forward.

    x:      (B, C, H, W)   NCHW input
    y:      (B, C)         per-sample style modulation
    weight: (O, C, K, K)   base convolution weights (OIHW)
    returns (B, O, H, W)
    """
    # TODO(synk): only the stride=1 / dilation=1 / odd-K path of the PyTorch
    # module is lowered (other settings change the output geometry).
    assert stride == 1 and dilation == 1
    B, C, H, W = x.shape
    O, Ci, K, K2 = weight.shape
    assert Ci == C and K == K2
    assert K % 2 == 1, "even kernel sizes need asymmetric 'same' padding"

    out_dtype = x.dtype if out_dtype is None else out_dtype
    out_bytes = jnp.dtype(out_dtype).itemsize

    KKC = K * K * C
    KKC_P = ((KKC + 127) // 128) * 128          # pad contraction to lane mult
    HW = H * W
    pad = (dilation * (K - 1)) // 2

    # --- wrapper-side relayouts: lane-dense operands ------------------------
    # im2col slab (B, K*K*C, H*W), tap-major / channel-fast ordering, bf16.
    x_pad = jnp.pad(x, ((0, 0), (0, 0), (pad, pad), (pad, pad)))
    taps = jnp.stack(
        [x_pad[:, :, ki:ki + H, kj:kj + W]
         for ki in range(K) for kj in range(K)],
        axis=1)                                            # (B, K*K, C, H, W)
    cols = taps.reshape(B, KKC, HW).astype(jnp.bfloat16)   # (B, KKC, HW)

    # weight -> (O, K*K*C) bf16 with the same (ki, kj, c) column ordering.
    w2d = jnp.transpose(weight, (0, 2, 3, 1)).reshape(O, KKC).astype(jnp.bfloat16)

    # style scale -> (B, 1, K*K*C): (y + 1) repeated per tap, c fastest, f32.
    y1 = y.astype(jnp.float32) + 1.0                       # (B, C)
    scale = jnp.tile(y1, (1, K * K)).reshape(B, 1, KKC)

    # Demod factor precomputed exactly in f32 (hoisted out of the kernel):
    #   sum_{c,kh,kw} (w * (y+1))^2 = sum_c (y+1)_c^2 * sum_{kh,kw} w_c^2
    if demod:
        w_f32 = weight.astype(jnp.float32)
        w_sq_c = jnp.sum(w_f32 * w_f32, axis=(2, 3))       # (O, C)
        denom = jnp.einsum("bc,oc->bo", y1 * y1, w_sq_c) + EPSILON
        dfac = jax.lax.rsqrt(denom)                        # (B, O)
    else:
        dfac = jnp.ones((B, O), jnp.float32)
    dfac = dfac.reshape(B, O, 1)

    # Zero-pad the contraction axis to KKC_P (w pad = 0 => zero contribution).
    if KKC_P != KKC:
        pk = KKC_P - KKC
        w2d = jnp.pad(w2d, ((0, 0), (0, pk)))
        cols = jnp.pad(cols, ((0, 0), (0, pk), (0, 0)))
        scale = jnp.pad(scale, ((0, 0), (0, 0), (0, pk)))

    # --- generation-aware tiling --------------------------------------------
    vmem_cap = _vmem_capacity_bytes()
    block_budget = int(0.45 * vmem_cap)
    vmem_limit = min(int(0.75 * vmem_cap), 100 * 1024 * 1024)
    TO, THW = _select_tiles(O, HW, KKC_P, out_bytes, block_budget)

    # O-tile axis innermost: cols block index is independent of it, so the
    # im2col tile stays resident across the whole output-channel sweep.
    grid = (B, HW // THW, O // TO)

    out = pl.pallas_call(
        _conv2dmod_kernel,
        out_shape=jax.ShapeDtypeStruct((B, O, HW), out_dtype),
        grid_spec=pltpu.PrefetchScalarGridSpec(
            num_scalar_prefetch=0,
            grid=grid,
            in_specs=[
                pl.BlockSpec((1, 1, KKC_P), lambda b, s, o: (b, 0, 0)),   # scale
                pl.BlockSpec((1, TO, 1), lambda b, s, o: (b, o, 0)),      # demod
                pl.BlockSpec((TO, KKC_P), lambda b, s, o: (o, 0)),        # weight
                pl.BlockSpec((1, KKC_P, THW), lambda b, s, o: (b, 0, s)), # cols
            ],
            out_specs=pl.BlockSpec((1, TO, THW), lambda b, s, o: (b, o, s)),
        ),
        compiler_params=pltpu.CompilerParams(
            dimension_semantics=("parallel", "parallel", "parallel"),
            vmem_limit_bytes=vmem_limit),
    )(scale, dfac, w2d, cols)

    return out.reshape(B, O, H, W)


# ----------------------------------------------------------------------------
# Pure-JAX reference (mirror of the PyTorch forward, f32 grouped conv).
# ----------------------------------------------------------------------------
def _reference(x, y, weight, demod=True):
    b, c, h, w = x.shape
    o = weight.shape[0]
    k = weight.shape[2]
    w1 = y[:, None, :, None, None]
    w2 = weight[None, :, :, :, :]
    weights = w2 * (w1 + 1.0)
    if demod:
        d = jax.lax.rsqrt(
            jnp.sum(weights ** 2, axis=(2, 3, 4), keepdims=True) + EPSILON)
        weights = weights * d
    x_r = x.reshape(1, b * c, h, w)
    weights = weights.reshape(b * o, c, k, k)
    pad = (k - 1) // 2
    out = jax.lax.conv_general_dilated(
        x_r, weights,
        window_strides=(1, 1),
        padding=((pad, pad), (pad, pad)),
        dimension_numbers=("NCHW", "OIHW", "NCHW"),
        feature_group_count=b)
    return out.reshape(b, o, h, w)


if __name__ == "__main__":
    key = jax.random.PRNGKey(0)
    k_w, k_x, k_y = jax.random.split(key, 3)

    B, C_IN, C_OUT, K, H, W = 2, 4, 8, 3, 16, 16

    # kaiming_normal_(fan_in, leaky_relu a=0) -> std = sqrt(2) / sqrt(fan_in)
    fan_in = C_IN * K * K
    std = sqrt(2.0) / sqrt(fan_in)
    weight = jax.random.normal(k_w, (C_OUT, C_IN, K, K), jnp.float32) * std

    x = jax.random.normal(k_x, (B, C_IN, H, W), jnp.float32)
    y = jax.random.normal(k_y, (B, C_IN), jnp.float32)

    # demod=True path
    out = conv2d_mod(x, y, weight, demod=True)
    out = jax.block_until_ready(out)
    ref = _reference(x, y, weight, demod=True)
    assert out.shape == (B, C_OUT, H, W)
    # bf16 matmul operands vs f32 reference -> loosened tolerance
    # (modulation / demod factor / accumulation remain f32).
    assert jnp.allclose(out, ref, atol=5e-2, rtol=5e-2), (
        float(jnp.max(jnp.abs(out - ref))))

    # demod=False path
    out_nd = jax.block_until_ready(conv2d_mod(x, y, weight, demod=False))
    ref_nd = _reference(x, y, weight, demod=False)
    assert jnp.allclose(out_nd, ref_nd, atol=5e-2, rtol=5e-2), (
        float(jnp.max(jnp.abs(out_nd - ref_nd))))

    print("KERNEL_OK")
</pallas_src>

<mosaic_0001>
module attributes {stable_mosaic.version = 11 : i64} {
  func.func @_conv2dmod_kernel(%arg0: i32, %arg1: i32, %arg2: i32, %arg3: memref<1x1x128xf32, #tpu.memory_space<vmem>>, %arg4: memref<1x8x1xf32, #tpu.memory_space<vmem>>, %arg5: memref<8x128xbf16, #tpu.memory_space<vmem>>, %arg6: memref<1x128x256xbf16, #tpu.memory_space<vmem>>, %arg7: memref<1x8x256xf32, #tpu.memory_space<vmem>>) attributes {dimension_semantics = [#tpu.dimension_semantics<parallel>, #tpu.dimension_semantics<parallel>, #tpu.dimension_semantics<parallel>], iteration_bounds = array<i64: 2, 1, 1>, scalar_prefetch = 0 : i64, scratch_operands = 0 : i64, tpu.core_type = #tpu.core_type<tc>, window_params = [{transform_indices = @transform_0, window_bounds = array<i64: 1, 1, 128>}, {transform_indices = @transform_1, window_bounds = array<i64: 1, 8, 1>}, {transform_indices = @transform_2, window_bounds = array<i64: 8, 128>}, {transform_indices = @transform_3, window_bounds = array<i64: 1, 128, 256>}, {transform_indices = @transform_4, window_bounds = array<i64: 1, 8, 256>}]} {
    %c0 = arith.constant 0 : index
    %c0_0 = arith.constant 0 : index
    %0 = vector.load %arg5[%c0, %c0_0] : memref<8x128xbf16, #tpu.memory_space<vmem>>, vector<8x128xbf16>
    %1 = arith.extf %0 : vector<8x128xbf16> to vector<8x128xf32>
    %c0_1 = arith.constant 0 : index
    %c0_2 = arith.constant 0 : index
    %c0_3 = arith.constant 0 : index
    %2 = vector.load %arg3[%c0_1, %c0_2, %c0_3] : memref<1x1x128xf32, #tpu.memory_space<vmem>>, vector<1x1x128xf32>
    %3 = vector.shape_cast %2 : vector<1x1x128xf32> to vector<1x128xf32>
    %c0_4 = arith.constant 0 : index
    %c0_5 = arith.constant 0 : index
    %c0_6 = arith.constant 0 : index
    %4 = vector.load %arg4[%c0_4, %c0_5, %c0_6] : memref<1x8x1xf32, #tpu.memory_space<vmem>>, vector<1x8x1xf32>
    %5 = vector.shape_cast %4 : vector<1x8x1xf32> to vector<8x1xf32>
    %6 = vector.broadcast %3 : vector<1x128xf32> to vector<8x128xf32>
    %7 = arith.mulf %1, %6 : vector<8x128xf32>
    %8 = vector.broadcast %5 : vector<8x1xf32> to vector<8x128xf32>
    %9 = arith.mulf %7, %8 : vector<8x128xf32>
    %10 = arith.truncf %9 : vector<8x128xf32> to vector<8x128xbf16>
    %c0_7 = arith.constant 0 : index
    %c0_8 = arith.constant 0 : index
    %c0_9 = arith.constant 0 : index
    %11 = vector.load %arg6[%c0_7, %c0_8, %c0_9] : memref<1x128x256xbf16, #tpu.memory_space<vmem>>, vector<1x128x256xbf16>
    %12 = vector.shape_cast %11 : vector<1x128x256xbf16> to vector<128x256xbf16>
    %cst = arith.constant dense<0.000000e+00> : vector<8x256xf32>
    %13 = tpu.matmul %10, %12, %cst {dimension_numbers = #tpu.dot_dimension_numbers<[1], [0], [0], [1], [0, 0, 1, 1], [], []>} : vector<8x128xbf16>, vector<128x256xbf16>, vector<8x256xf32> -> vector<8x256xf32>
    %c0_10 = arith.constant 0 : index
    %c0_11 = arith.constant 0 : index
    %c0_12 = arith.constant 0 : index
    %14 = vector.load %arg7[%c0_10, %c0_11, %c0_12] : memref<1x8x256xf32, #tpu.memory_space<vmem>>, vector<1x8x256xf32>
    %15 = vector.shape_cast %14 : vector<1x8x256xf32> to vector<8x256xf32>
    %16 = vector.shape_cast %13 : vector<8x256xf32> to vector<1x8x256xf32>
    tpu.vector_store %arg7[%c0_10, %c0_11, %c0_12], %16 {strides = array<i32>} : memref<1x8x256xf32, #tpu.memory_space<vmem>>, vector<1x8x256xf32>,
    return
  }
  func.func @transform_0(%arg0: i32, %arg1: i32, %arg2: i32) -> (i32, i32, i32) {
    %c0_i32 = arith.constant 0 : i32
    %c0_i32_0 = arith.constant 0 : i32
    %c0_i32_1 = arith.constant 0 : i32
    return %arg0, %c0_i32, %c0_i32_0 : i32, i32, i32
  }
  func.func @transform_1(%arg0: i32, %arg1: i32, %arg2: i32) -> (i32, i32, i32) {
    %c0_i32 = arith.constant 0 : i32
    %c0_i32_0 = arith.constant 0 : i32
    return %arg0, %arg2, %c0_i32 : i32, i32, i32
  }
  func.func @transform_2(%arg0: i32, %arg1: i32, %arg2: i32) -> (i32, i32) {
    %c0_i32 = arith.constant 0 : i32
    %c0_i32_0 = arith.constant 0 : i32
    return %arg2, %c0_i32 : i32, i32
  }
  func.func @transform_3(%arg0: i32, %arg1: i32, %arg2: i32) -> (i32, i32, i32) {
    %c0_i32 = arith.constant 0 : i32
    %c0_i32_0 = arith.constant 0 : i32
    return %arg0, %c0_i32, %arg1 : i32, i32, i32
  }
  func.func @transform_4(%arg0: i32, %arg1: i32, %arg2: i32) -> (i32, i32, i32) {
    %c0_i32 = arith.constant 0 : i32
    return %arg0, %arg2, %arg1 : i32, i32, i32
  }
}

</mosaic_0001>

<llo_original>
// kernel: tpu_custom_call.1
$region0: #{tpu_custom_call.1}
  #allocation0 [shape = 'u32[]', space=smem, size = 0x4, offset = 0x4, fixed_abs, tag = 'smem constant byte address 0x4 - core index']
  #allocation1 [shape = 'u32[144,128]{1,0:T(1,128)}', space=vmem, size = 0x12000, scoped, tag = 'internal scratch']
  %s0 = inlined_call_operand.vmem [shape: f32[2,1,128], index: 0, kind: input, shape index: {}]
  %s1 = inlined_call_operand.vmem [shape: f32[2,8,1], index: 1, kind: input, shape index: {}]
  %s2 = inlined_call_operand.vmem [shape: bf16[8,128], index: 2, kind: input, shape index: {}]
  %s3 = inlined_call_operand.hbm [shape: bf16[2,128,256], index: 3, kind: input, shape index: {}]
  %s4 = inlined_call_operand.hbm [shape: f32[2,8,256], index: 4, kind: output, shape index: {}]
  %s5 = sld [smem:[#allocation0]]
  $region53: #{tpu_custom_call.1} parent=0
    _
  %s7 = ssub.s32 1, %s5
  %s8 = scalar_select 0, %s7, %s5
  $region1: #{tpu_custom_call.1} parent=0
    #allocation2 [shape = 'u8[131072]{0}', space=vmem, size = 0x20000, scoped, tag = 'input window, operand 3']
    #allocation3 [shape = 's32[2]{0}', space=sflag, size = 0x8, scoped, tag = 'scoped memory for tpu_custom_call.1']
    #allocation4 [shape = 's32[2]{0}', space=sflag, size = 0x8, scoped, tag = 'scoped memory for tpu_custom_call.1']
    #allocation5 [shape = 'u8[16384]{0}', space=vmem, size = 0x4000, scoped, tag = 'output window, operand 0']
    %9 = vsyncpa [#allocation3], 0
    %s10 = scalar_lea.sflag [#allocation3], 1
    %11 = vsyncpa %s10, 0
    %12 = vsyncpa [#allocation4], 0
    %s13 = scalar_lea.sflag [#allocation4], 1
    %14 = vsyncpa %s13, 0
    loop: start=0, step=1, limit=4
    $region2: #{tpu_custom_call.1} parent=1 // loop_pre_header
      _
    $region3: #{tpu_custom_call.1} parent=1 // loop_header
      %s16 = sphi 0, %s20
      %p17 = scmp.ge.s32.totalorder %s16, 4
      %s23 = sphi 0, %s42
      %s24 = sphi 0, %s38
      %s25 = sphi 0, %s34
      %s26 = sphi 0, %s23
      %s27 = sphi 0, %s24
      %s28 = sphi 0, %s25
      %s29 = sphi 0, %s26
      %s30 = sphi 0, %s27
      %s31 = sphi 0, %s28
      %s45 = sphi 0, %s47
      %s48 = sphi 0, %s45
      %s49 = sphi 0, %s48
      %s65 = sphi 0, %s49
      %s73 = sphi 0, %s75
      %s76 = sphi 0, %s73
      %s77 = sphi 0, %s76
      %s93 = sphi 0, %s77
      %s99 = sphi 0, %s101
      %s102 = sphi 0, %s99
      %s103 = sphi 0, %s102
      %s119 = sphi 0, %s103
      %s127 = sphi 0, %s129
      %s130 = sphi 0, %s127
      %s131 = sphi 0, %s130
      %s147 = sphi 0, %s131
      %s157 = sphi 0, %s159
      %s160 = sphi 0, %s157
      %s161 = sphi 0, %s160
      %s177 = sphi 0, %s161
    $region4: #{tpu_custom_call.1} parent=1 // loop_header_branch
      %19 = sbr.rel (%p17) target = $region8
    $region5: #{tpu_custom_call.1} parent=1 // loop_body
      %s21 = ssub.s32 %s16, 1
      %s22 = ssub.s32 %s16, 2
      %s32 = sadd.s32 1, %s25
      %p33 = scmp.ge.s32.totalorder %s32, 1
      %s34 = scalar_select %p33, 0, %s32
      %s35 = sadd.s32 1, %s24
      %s36 = scalar_select %p33, %s35, %s24
      %p37 = scmp.ge.s32.totalorder %s36, 1
      %s38 = scalar_select %p37, 0, %s36
      %s39 = sadd.s32 1, %s23
      %s40 = scalar_select %p37, %s39, %s23
      %p41 = scmp.ge.s32.totalorder %s40, 2
      %s42 = scalar_select %p41, 0, %s40
      %s43 = ssub.s32 %s23, %s42
      %p44 = scmp.eq.s32.totalorder %s43, 0
      %s46 = sadd.s32 %s45, 1
      %s47 = scalar_select %p44, %s45, %s46
      %p50 = pneg %p44
      %p51 = scmp.eq.s32.totalorder %s16, 1
      %p52 = por %p50, %p51
      %p53 = scmp.ne.s32.totalorder %s45, %s48
      %p54 = scmp.eq.s32.totalorder %s16, 0
      %p55 = por %p53, %p54
      %p56 = scmp.ne.s32.totalorder %s45, %s48
      %p57 = scmp.eq.s32.totalorder %s21, 1
      %p58 = por %p56, %p57
      %p59 = scmp.ne.s32.totalorder %s48, %s49
      %p60 = scmp.eq.s32.totalorder %s21, 0
      %p61 = por %p59, %p60
      %p62 = scmp.ne.s32.totalorder %s48, %s49
      %p63 = scmp.eq.s32.totalorder %s22, 1
      %p64 = por %p62, %p63
      %p66 = scmp.ne.s32.totalorder %s49, %s65
      %p67 = scmp.eq.s32.totalorder %s22, 0
      %p68 = por %p66, %p67
      %s69 = ssub.s32 %s23, %s42
      %s70 = ssub.s32 %s25, %s34
      %s71 = sor.u32 %s69, %s70
      %p72 = scmp.eq.s32.totalorder %s71, 0
      %s74 = sadd.s32 %s73, 1
      %s75 = scalar_select %p72, %s73, %s74
      %p78 = pneg %p72
      %p79 = scmp.eq.s32.totalorder %s16, 1
      %p80 = por %p78, %p79
      %p81 = scmp.ne.s32.totalorder %s73, %s76
      %p82 = scmp.eq.s32.totalorder %s16, 0
      %p83 = por %p81, %p82
      %p84 = scmp.ne.s32.totalorder %s73, %s76
      %p85 = scmp.eq.s32.totalorder %s21, 1
      %p86 = por %p84, %p85
      %p87 = scmp.ne.s32.totalorder %s76, %s77
      %p88 = scmp.eq.s32.totalorder %s21, 0
      %p89 = por %p87, %p88
      %p90 = scmp.ne.s32.totalorder %s76, %s77
      %p91 = scmp.eq.s32.totalorder %s22, 1
      %p92 = por %p90, %p91
      %p94 = scmp.ne.s32.totalorder %s77, %s93
      %p95 = scmp.eq.s32.totalorder %s22, 0
      %p96 = por %p94, %p95
      %s97 = ssub.s32 %s25, %s34
      %p98 = scmp.eq.s32.totalorder %s97, 0
      %s100 = sadd.s32 %s99, 1
      %s101 = scalar_select %p98, %s99, %s100
      %p104 = pneg %p98
      %p105 = scmp.eq.s32.totalorder %s16, 1
      %p106 = por %p104, %p105
      %p107 = scmp.ne.s32.totalorder %s99, %s102
      %p108 = scmp.eq.s32.totalorder %s16, 0
      %p109 = por %p107, %p108
      %p110 = scmp.ne.s32.totalorder %s99, %s102
      %p111 = scmp.eq.s32.totalorder %s21, 1
      %p112 = por %p110, %p111
      %p113 = scmp.ne.s32.totalorder %s102, %s103
      %p114 = scmp.eq.s32.totalorder %s21, 0
      %p115 = por %p113, %p114
      %p116 = scmp.ne.s32.totalorder %s102, %s103
      %p117 = scmp.eq.s32.totalorder %s22, 1
      %p118 = por %p116, %p117
      %p120 = scmp.ne.s32.totalorder %s103, %s119
      %p121 = scmp.eq.s32.totalorder %s22, 0
      %p122 = por %p120, %p121
      %s123 = ssub.s32 %s23, %s42
      %s124 = ssub.s32 %s24, %s38
      %s125 = sor.u32 %s123, %s124
      %p126 = scmp.eq.s32.totalorder %s125, 0
      %s128 = sadd.s32 %s127, 1
      %s129 = scalar_select %p126, %s127, %s128
      %p132 = pneg %p126
      %p133 = scmp.eq.s32.totalorder %s16, 1
      %p134 = por %p132, %p133
      %p135 = scmp.ne.s32.totalorder %s127, %s130
      %p136 = scmp.eq.s32.totalorder %s16, 0
      %p137 = por %p135, %p136
      %p138 = scmp.ne.s32.totalorder %s127, %s130
      %p139 = scmp.eq.s32.totalorder %s21, 1
      %p140 = por %p138, %p139
      %p141 = scmp.ne.s32.totalorder %s130, %s131
      %p142 = scmp.eq.s32.totalorder %s21, 0
      %p143 = por %p141, %p142
      %p144 = scmp.ne.s32.totalorder %s130, %s131
      %p145 = scmp.eq.s32.totalorder %s22, 1
      %p146 = por %p144, %p145
      %p148 = scmp.ne.s32.totalorder %s131, %s147
      %p149 = scmp.eq.s32.totalorder %s22, 0
      %p150 = por %p148, %p149
      %s151 = ssub.s32 %s23, %s42
      %s152 = ssub.s32 %s25, %s34
      %s153 = sor.u32 %s151, %s152
      %s154 = ssub.s32 %s24, %s38
      %s155 = sor.u32 %s153, %s154
      %p156 = scmp.eq.s32.totalorder %s155, 0
      %s158 = sadd.s32 %s157, 1
      %s159 = scalar_select %p156, %s157, %s158
      %p162 = pneg %p156
      %p163 = scmp.eq.s32.totalorder %s16, 1
      %p164 = por %p162, %p163
      %p165 = scmp.ne.s32.totalorder %s157, %s160
      %p166 = scmp.eq.s32.totalorder %s16, 0
      %p167 = por %p165, %p166
      %p168 = scmp.ne.s32.totalorder %s157, %s160
      %p169 = scmp.eq.s32.totalorder %s21, 1
      %p170 = por %p168, %p169
      %p171 = scmp.ne.s32.totalorder %s160, %s161
      %p172 = scmp.eq.s32.totalorder %s21, 0
      %p173 = por %p171, %p172
      %p174 = scmp.ne.s32.totalorder %s160, %s161
      %p175 = scmp.eq.s32.totalorder %s22, 1
      %p176 = por %p174, %p175
      %p178 = scmp.ne.s32.totalorder %s161, %s177
      %p179 = scmp.eq.s32.totalorder %s22, 0
      %p180 = por %p178, %p179
      %p181 = scmp.le.s32.totalorder 1, %s16
      %p182 = scmp.lt.s32.totalorder %s16, 3
      %p183 = pnand %p181, %p182
      %p184 = pneg %p183
      // Predicated region
      $region9: #{tpu_custom_call.1} parent=5 // pred_check
        _
      $region10: #{tpu_custom_call.1} parent=5 // pred_check_branch
        %186 = sbr.rel (%p183) target = $region12
      $region11: #{tpu_custom_call.1} parent=5 // pred_region
        %s187 = ssub.s32 %s16, 1
        // Predicated region
        $region13: #{tpu_custom_call.1} parent=11 // pred_check
          %p188 = pneg %p115
        $region14: #{tpu_custom_call.1} parent=11 // pred_check_branch
          %190 = sbr.rel (%p188) target = $region16
        $region15: #{tpu_custom_call.1} parent=11 // pred_region
          %p191 = scmp.lt.s32.totalorder %s28, 0
          %s192 = scalar_select %p191, %s28, 0
          %s193 = smul.addr %s192, 4
          %s194 = scalar_lea.vmem %s2, %s193
        $region16: #{tpu_custom_call.1} parent=11 // pred_fallthru
          _
      $region12: #{tpu_custom_call.1} parent=5 // pred_fallthru
        _
      %p195 = scmp.lt.s32.totalorder %s16, 2
      // Predicated region
      $region17: #{tpu_custom_call.1} parent=5 // pred_check
        %p196 = pneg %p195
      $region18: #{tpu_custom_call.1} parent=5 // pred_check_branch
        %198 = sbr.rel (%p196) target = $region20
      $region19: #{tpu_custom_call.1} parent=5 // pred_region
        // Predicated region
        $region21: #{tpu_custom_call.1} parent=19 // pred_check
          %p199 = pneg %p55
        $region22: #{tpu_custom_call.1} parent=19 // pred_check_branch
          %201 = sbr.rel (%p199) target = $region24
        $region23: #{tpu_custom_call.1} parent=19 // pred_region
          %p202 = scmp.lt.s32.totalorder %s23, 1
          %s203 = scalar_select %p202, %s23, 1
          %s204 = scalar_lea.vmem %s0, %s203
        $region24: #{tpu_custom_call.1} parent=19 // pred_fallthru
          _
        // Predicated region
        $region25: #{tpu_custom_call.1} parent=19 // pred_check
          %p205 = pneg %p83
        $region26: #{tpu_custom_call.1} parent=19 // pred_check_branch
          %207 = sbr.rel (%p205) target = $region28
        $region27: #{tpu_custom_call.1} parent=19 // pred_region
          %p208 = scmp.lt.s32.totalorder %s23, 1
          %s209 = scalar_select %p208, %s23, 1
          %p210 = scmp.lt.s32.totalorder %s25, 0
          %s211 = scalar_select %p210, %s25, 0
          %s212 = sadd.s32 %s211, %s209
          %s213 = smul.addr %s212, 8
          %s214 = scalar_lea.vmem %s1, %s213
        $region28: #{tpu_custom_call.1} parent=19 // pred_fallthru
          _
        // Predicated region
        $region29: #{tpu_custom_call.1} parent=19 // pred_check
          %p215 = pneg %p137
        $region30: #{tpu_custom_call.1} parent=19 // pred_check_branch
          %217 = sbr.rel (%p215) target = $region32
        $region31: #{tpu_custom_call.1} parent=19 // pred_region
          %s218 = sand.u32 %s127, 1
          %s219 = scalar_lea.sflag [#allocation3], %s218
          %s220 = sand.u32 %s127, 1
          %s221 = smul.addr %s220, 128
          %s222 = scalar_lea.vmem [#allocation2], %s221
          %s223 = smul.u32 2, %s24
          %s225 = ssub.s32 2048, 2048
          %226 = vsyncadd %s219, %s225
          %s227 = smul.addr %s23, 32
          %s228 = sadd.s32 %s223, %s227
          %s229 = smul.addr %s228, 64
          %s230 = scalar_lea.hbm %s3, %s229
          %s231 = sshll.u32 %s222, 4
          %s232 = int_to_ptr.vmem [resolvable:$true] %s231
          %237 = dma.hbm_to_vmem [thread:$0]  %s230, 2048, %s232, %s219, 128, 128, 8
        $region32: #{tpu_custom_call.1} parent=19 // pred_fallthru
          _
      $region20: #{tpu_custom_call.1} parent=5 // pred_fallthru
        _
      %p238 = scmp.le.s32.totalorder 1, %s16
      %p239 = scmp.lt.s32.totalorder %s16, 3
      %p240 = pnand %p238, %p239
      %p241 = pneg %p240
      // Predicated region
      $region33: #{tpu_custom_call.1} parent=5 // pred_check
        _
      $region34: #{tpu_custom_call.1} parent=5 // pred_check_branch
        %243 = sbr.rel (%p240) target = $region36
      $region35: #{tpu_custom_call.1} parent=5 // pred_region
        %s244 = ssub.s32 %s16, 1
        %s245 = sand.u32 %s130, 1
        %s246 = scalar_lea.sflag [#allocation3], %s245
        %s247 = sand.u32 %s130, 1
        %s248 = smul.addr %s247, 128
        %s249 = scalar_lea.vmem [#allocation2], %s248
        // Predicated region
        $region37: #{tpu_custom_call.1} parent=35 // pred_check
          %p250 = pneg %p143
        $region38: #{tpu_custom_call.1} parent=35 // pred_check_branch
          %252 = sbr.rel (%p250) target = $region40
        $region39: #{tpu_custom_call.1} parent=35 // pred_region
          %253 = dma.done %s246, 2048
        $region40: #{tpu_custom_call.1} parent=35 // pred_fallthru
          _
        %p254 = scmp.lt.s32.totalorder %s26, 1
        %s255 = scalar_select %p254, %s26, 1
        %s256 = scalar_lea.vmem %s0, %s255
        %p257 = pneg %p61
        %p258 = pneg %p58
        %p259 = scmp.lt.s32.totalorder %s26, 1
        %s260 = scalar_select %p259, %s26, 1
        %p261 = scmp.lt.s32.totalorder %s28, 0
        %s262 = scalar_select %p261, %s28, 0
        %s263 = sadd.s32 %s262, %s260
        %s264 = smul.addr %s263, 8
        %s265 = scalar_lea.vmem %s1, %s264
        %p266 = pneg %p89
        %p267 = pneg %p86
        %p268 = scmp.lt.s32.totalorder %s28, 0
        %s269 = scalar_select %p268, %s28, 0
        %s270 = smul.addr %s269, 4
        %s271 = scalar_lea.vmem %s2, %s270
        %p272 = pneg %p115
        %p273 = pneg %p112
        %s274 = sand.u32 %s130, 1
        %s275 = scalar_lea.sflag [#allocation3], %s274
        %s276 = sand.u32 %s130, 1
        %s277 = smul.addr %s276, 128
        %s278 = scalar_lea.vmem [#allocation2], %s277
        %p279 = pneg %p143
        %p280 = pneg %p140
        %p281 = pneg %p173
        %p282 = pneg %p170
        %s283 = sand.u32 %s160, 1
        %s284 = scalar_lea.sflag [#allocation4], %s283
        %s285 = sand.u32 %s160, 1
        %s286 = smul.addr %s285, 16
        %s287 = scalar_lea.vmem [#allocation5], %s286
        %p288 = scmp.lt.s32.totalorder %s26, 1
        %s289 = scalar_select %p288, %s26, 1
        %s290 = scalar_lea.vmem %s0, %s289
        %p291 = scmp.lt.s32.totalorder %s26, 1
        %s292 = scalar_select %p291, %s26, 1
        %p293 = scmp.lt.s32.totalorder %s28, 0
        %s294 = scalar_select %p293, %s28, 0
        %s295 = sadd.s32 %s294, %s292
        %s296 = smul.addr %s295, 8
        %s297 = scalar_lea.vmem %s1, %s296
        %p298 = scmp.lt.s32.totalorder %s28, 0
        %s299 = scalar_select %p298, %s28, 0
        %s300 = smul.addr %s299, 4
        %s301 = scalar_lea.vmem %s2, %s300
        %s302 = smul.u32 2, %s27
        %s303 = smul.u32 2, %s27
        %v305 = vld [vmem:[%s301] sm:$0xf]
        %v306 = vunpack.c.l.bf16 %v305
        %v307 = vld [vmem:[%s290] sm:$0x1]
        %v308 = vld [vmem:[%s297] sm:$0xff]
        %v310 = vlaneseq
        %v311 = vshrl.u32 %v310, 7
        %v312 = vsub.s32 0, %v311
        %v313 = vrot.slane %v307, %v312
        %v315 = vmul.f32 %v306, %v313
        %317 = vset.pattern.permute.xlu0 0
        %318 = vperm.xlu0 %317, %v308
        %v319 = vpop.permute.xlu0 %318
        %v321 = vmul.f32 %v315, %v319
        %v322 = vpack.c.bf16 %v321, %v321
        %v323 = vld [vmem:[%s249] sm:$0xff]
        %v324 = vld [vmem:[%s249 + $0x8] sm:$0xff]
        %v325 = vld [vmem:[%s249 + $0x10] sm:$0xff]
        %v326 = vld [vmem:[%s249 + $0x18] sm:$0xff]
        %v327 = vld [vmem:[%s249 + $0x20] sm:$0xff]
        %v328 = vld [vmem:[%s249 + $0x28] sm:$0xff]
        %v329 = vld [vmem:[%s249 + $0x30] sm:$0xff]
        %v330 = vld [vmem:[%s249 + $0x38] sm:$0xff]
        %v331 = vld [vmem:[%s249 + $0x40] sm:$0xff]
        %v332 = vld [vmem:[%s249 + $0x48] sm:$0xff]
        %v333 = vld [vmem:[%s249 + $0x50] sm:$0xff]
        %v334 = vld [vmem:[%s249 + $0x58] sm:$0xff]
        %v335 = vld [vmem:[%s249 + $0x60] sm:$0xff]
        %v336 = vld [vmem:[%s249 + $0x68] sm:$0xff]
        %v337 = vld [vmem:[%s249 + $0x70] sm:$0xff]
        %v338 = vld [vmem:[%s249 + $0x78] sm:$0xff]
        %v355 = vunpack.c.l.b16 %v323
        %v356 = vunpack.c.h.b16 %v323
        %v357 = vunpack.c.l.b16 %v324
        %v358 = vunpack.c.h.b16 %v324
        %v359 = vunpack.c.l.b16 %v325
        %v360 = vunpack.c.h.b16 %v325
        %v361 = vunpack.c.l.b16 %v326
        %v362 = vunpack.c.h.b16 %v326
        %v363 = vunpack.c.l.b16 %v327
        %v364 = vunpack.c.h.b16 %v327
        %v365 = vunpack.c.l.b16 %v328
        %v366 = vunpack.c.h.b16 %v328
        %v367 = vunpack.c.l.b16 %v329
        %v368 = vunpack.c.h.b16 %v329
        %v369 = vunpack.c.l.b16 %v330
        %v370 = vunpack.c.h.b16 %v330
        %v371 = vunpack.c.l.b16 %v331
        %v372 = vunpack.c.h.b16 %v331
        %v373 = vunpack.c.l.b16 %v332
        %v374 = vunpack.c.h.b16 %v332
        %v375 = vunpack.c.l.b16 %v333
        %v376 = vunpack.c.h.b16 %v333
        %v377 = vunpack.c.l.b16 %v334
        %v378 = vunpack.c.h.b16 %v334
        %v379 = vunpack.c.l.b16 %v335
        %v380 = vunpack.c.h.b16 %v335
        %v381 = vunpack.c.l.b16 %v336
        %v382 = vunpack.c.h.b16 %v336
        %v383 = vunpack.c.l.b16 %v337
        %v384 = vunpack.c.h.b16 %v337
        %v385 = vunpack.c.l.b16 %v338
        %v386 = vunpack.c.h.b16 %v338
        %v387 = vpack.c.b16 %v357, %v355
        %v388 = vpack.c.b16 %v358, %v356
        %v389 = vpack.c.b16 %v361, %v359
        %v390 = vpack.c.b16 %v362, %v360
        %v391 = vpack.c.b16 %v365, %v363
        %v392 = vpack.c.b16 %v366, %v364
        %v393 = vpack.c.b16 %v369, %v367
        %v394 = vpack.c.b16 %v370, %v368
        %v395 = vpack.c.b16 %v373, %v371
        %v396 = vpack.c.b16 %v374, %v372
        %v397 = vpack.c.b16 %v377, %v375
        %v398 = vpack.c.b16 %v378, %v376
        %v399 = vpack.c.b16 %v381, %v379
        %v400 = vpack.c.b16 %v382, %v380
        %v401 = vpack.c.b16 %v385, %v383
        %v402 = vpack.c.b16 %v386, %v384
        %419 = vmatprep.subr.bf16.mxu0 %v388
        %420 = vmatpush1.bf16.msra.mxu0 %v387
        %421 = vmatprep.subr.bf16.mxu0 %v390
        %422 = vmatpush1.bf16.msra.mxu0 %v389
        %423 = vmatprep.subr.bf16.mxu0 %v392
        %424 = vmatpush1.bf16.msra.mxu0 %v391
        %425 = vmatprep.subr.bf16.mxu0 %v394
        %426 = vmatpush1.bf16.msra.mxu0 %v393
        %427 = vmatprep.subr.bf16.mxu0 %v396
        %428 = vmatpush1.bf16.msra.mxu0 %v395
        %429 = vmatprep.subr.bf16.mxu0 %v398
        %430 = vmatpush1.bf16.msra.mxu0 %v397
        %431 = vmatprep.subr.bf16.mxu0 %v400
        %432 = vmatpush1.bf16.msra.mxu0 %v399
        %433 = vmatprep.subr.bf16.mxu0 %v402
        %434 = vmatpush1.bf16.msra.mxu0 %v401
        %435 = vmatprep.subr.bf16.mxu0 0
        %436 = vmatpush1.bf16.msra.mxu0 0
        %437 = vmatprep.subr.bf16.mxu0 0
        %438 = vmatpush1.bf16.msra.mxu0 0
        %439 = vmatprep.subr.bf16.mxu0 0
        %440 = vmatpush1.bf16.msra.mxu0 0
        %441 = vmatprep.subr.bf16.mxu0 0
        %442 = vmatpush1.bf16.msra.mxu0 0
        %443 = vmatprep.subr.bf16.mxu0 0
        %444 = vmatpush1.bf16.msra.mxu0 0
        %445 = vmatprep.subr.bf16.mxu0 0
        %446 = vmatpush1.bf16.msra.mxu0 0
        %447 = vmatprep.subr.bf16.mxu0 0
        %448 = vmatpush1.bf16.msra.mxu0 0
        %449 = vmatprep.subr.bf16.mxu0 0
        %450 = vmatpush1.bf16.msra.mxu0 0
        %451 = vmatprep.mubr.bf16.mxu0 0
        %452 = vmatmul.mubr.bf16.gmra.mrb[0].mxu0 %v322
        %v453 = vpop.f32.mrb[0].mxu0
        %v454 = vadd.f32 0.0, %v453
        %v455 = vpop.f32.mrb[0].mxu0
        %v456 = vadd.f32 0.0, %v455
        %v457 = vpop.f32.mrb[0].mxu0
        %v458 = vpop.f32.mrb[0].mxu0
        %459 = vdwg.mxu0
        %460 = vst [vmem:[%s287] sm:$0xff] %v454
        %461 = vst [vmem:[%s287 + $0x8] sm:$0xff] %v456
        %s462 = sand.u32 %s160, 1
        %s463 = scalar_lea.sflag [#allocation4], %s462
        %s464 = sand.u32 %s160, 1
        %s465 = smul.addr %s464, 16
        %s466 = scalar_lea.vmem [#allocation5], %s465
        // Predicated region
        $region41: #{tpu_custom_call.1} parent=35 // pred_check
          %p467 = pneg %p170
        $region42: #{tpu_custom_call.1} parent=35 // pred_check_branch
          %469 = sbr.rel (%p467) target = $region44
        $region43: #{tpu_custom_call.1} parent=35 // pred_region
          %s470 = smul.u32 2, %s27
          %s472 = ssub.s32 256, 256
          %473 = vsyncadd %s463, %s472
          %s474 = smul.addr %s28, 2
          %s475 = sadd.s32 %s470, %s474
          %s476 = smul.addr %s26, 2
          %s477 = sadd.s32 %s475, %s476
          %s478 = smul.addr %s477, 128
          %s479 = scalar_lea.hbm %s4, %s478
          %s481 = sshll.u32 %s466, 4
          %s482 = int_to_ptr.vmem [resolvable:$true] %s481
          %484 = dma.vmem_to_hbm [thread:$0]  %s482, 256, %s479, %s463
        $region44: #{tpu_custom_call.1} parent=35 // pred_fallthru
          _
      $region36: #{tpu_custom_call.1} parent=5 // pred_fallthru
        _
      %p485 = scmp.le.s32.totalorder 2, %s16
      // Predicated region
      $region45: #{tpu_custom_call.1} parent=5 // pred_check
        %p486 = pneg %p485
      $region46: #{tpu_custom_call.1} parent=5 // pred_check_branch
        %488 = sbr.rel (%p486) target = $region48
      $region47: #{tpu_custom_call.1} parent=5 // pred_region
        %s489 = ssub.s32 %s16, 2
        // Predicated region
        $region49: #{tpu_custom_call.1} parent=47 // pred_check
          %p490 = pneg %p176
        $region50: #{tpu_custom_call.1} parent=47 // pred_check_branch
          %492 = sbr.rel (%p490) target = $region52
        $region51: #{tpu_custom_call.1} parent=47 // pred_region
          %s493 = sand.u32 %s161, 1
          %s494 = scalar_lea.sflag [#allocation4], %s493
          %s495 = sand.u32 %s161, 1
          %s496 = smul.addr %s495, 16
          %s497 = scalar_lea.vmem [#allocation5], %s496
          %498 = dma.done %s494, 256
        $region52: #{tpu_custom_call.1} parent=47 // pred_fallthru
          _
      $region48: #{tpu_custom_call.1} parent=5 // pred_fallthru
        _
    $region6: #{tpu_custom_call.1} parent=1 // loop_footer
      %s20 = sadd.s32 1, %s16
    $region7: #{tpu_custom_call.1} parent=1 // loop_footer_branch
      %15 = sbr.rel target = $region3
    $region8: #{tpu_custom_call.1} parent=1 // loop_exit
      _
    %499 = vsyncpa [#allocation3], 1
    %s500 = scalar_lea.sflag [#allocation3], 1
    %501 = vsyncpa %s500, 1
    %502 = vsyncpa [#allocation4], 1
    %s503 = scalar_lea.sflag [#allocation4], 1
    %504 = vsyncpa %s503, 1

</llo_original>
